<compile_context>
chip_gen: v7x
topology: tpu7x:2x2x1
jax: 0.10.0
libtpu: 0.0.40
codegen_flags: <defaults>
</compile_context>

<pallas_src>
import math

import jax
import jax.numpy as jnp
from jax.experimental import pallas as pl
from jax.experimental.pallas import tpu as pltpu

NEG_SLOPE = 0.01       # nn.LeakyReLU default negative slope
BN_EPS = 1e-5          # nn.BatchNorm2d default eps
ACT_DTYPE = jnp.bfloat16   # inter-layer activation dtype (f32 accumulate in-kernel)


def _round_up(x, m):
    return ((x + m - 1) // m) * m


# --------------------------------------------------------------------------
# Pallas kernels
# --------------------------------------------------------------------------
def _make_mm_kernel(has_residual: bool):
    """Single-K-block matmul with fused bias / residual / LeakyReLU epilogue.

    grid = (M_tiles, N_tiles), both parallel; the full K extent is one block so
    there is no accumulator scratch and no init/epilogue gating — the fused
    result is written straight to o_ref.
    The per-column `slope` row implements the activation: NEG_SLOPE for real
    activated columns, 1.0 for identity (e.g. downsample) columns.
    """

    def kernel(*refs):
        if has_residual:
            a_ref, b_ref, bias_ref, slope_ref, res_ref, o_ref = refs
        else:
            a_ref, b_ref, bias_ref, slope_ref, o_ref = refs
            res_ref = None
        y = jnp.dot(a_ref[...], b_ref[...], preferred_element_type=jnp.float32)
        y = y + bias_ref[...]                       # (1, TN) broadcasts
        if res_ref is not None:
            y = y + res_ref[...].astype(jnp.float32)
        y = jnp.where(y >= 0, y, y * slope_ref[...])
        o_ref[...] = y.astype(o_ref.dtype)

    return kernel


def _maxpool_kernel(*refs):
    # refs[:-1]: 9 shifted-tap tiles (TM, C); pairwise tree-reduce the max
    # (depth 4 instead of an 8-deep serial chain).
    o_ref = refs[-1]
    taps = [r[...] for r in refs[:-1]]
    while len(taps) > 1:
        nxt = [jnp.maximum(taps[i], taps[i + 1])
               for i in range(0, len(taps) - 1, 2)]
        if len(taps) % 2:
            nxt.append(taps[-1])
        taps = nxt
    o_ref[...] = taps[0]


def _avgpool_kernel(x_ref, o_ref):
    # x: (N, HW, C) -> (N, C) mean over the spatial axis, f32 accumulate.
    hw = x_ref.shape[1]
    s = jnp.sum(x_ref[...].astype(jnp.float32), axis=1)
    o_ref[...] = (s * (1.0 / hw)).astype(o_ref.dtype)


# --------------------------------------------------------------------------
# Pallas-call wrappers
# --------------------------------------------------------------------------
def _matmul_fused(a, b, bias_row, slope_row, *, residual=None,
                  out_dtype=ACT_DTYPE):
    """out = where(y>=0, y, slope*y),  y = A@B + bias [+ residual].

    Single full-K block per output tile (the whole network is grid-step /
    dispatch bound at these sizes); bf16 operands, f32 MXU accumulation.
    """
    M, K = a.shape
    K2, N = b.shape
    assert K == K2

    Kp = _round_up(K, 128)                 # full-K single block
    Np = _round_up(N, 128)
    Mp = _round_up(M, 16)                  # bf16: 16 rows/vreg -> unmasked vst
    if Mp > 256:
        TM = 256
        Mp = _round_up(M, TM)
    else:
        TM = Mp
    # Split N into 2 tiles when wide enough so v7x's second TensorCore gets
    # work; keep a single tile otherwise (fewest steps on v5e/v6e).
    if Np >= 256 and (Np // 2) % 128 == 0:
        TN = Np // 2
    else:
        TN = Np

    a_p = jnp.pad(a, ((0, Mp - M), (0, Kp - K))).astype(jnp.bfloat16)
    b_p = jnp.pad(b, ((0, Kp - K), (0, Np - N))).astype(jnp.bfloat16)
    bias_p = jnp.pad(bias_row.reshape(1, N).astype(jnp.float32),
                     ((0, 0), (0, Np - N)))
    slope_p = jnp.pad(slope_row.reshape(1, N).astype(jnp.float32),
                      ((0, 0), (0, Np - N)))

    args = [a_p, b_p, bias_p, slope_p]
    in_specs = [
        pl.BlockSpec((TM, Kp), lambda i, j: (i, 0)),
        pl.BlockSpec((Kp, TN), lambda i, j: (0, j)),
        pl.BlockSpec((1, TN), lambda i, j: (0, j)),
        pl.BlockSpec((1, TN), lambda i, j: (0, j)),
    ]
    if residual is not None:
        rM, rN = residual.shape
        r_p = jnp.pad(residual, ((0, Mp - rM), (0, Np - rN))).astype(jnp.bfloat16)
        args.append(r_p)
        in_specs.append(pl.BlockSpec((TM, TN), lambda i, j: (i, j)))

    out = pl.pallas_call(
        _make_mm_kernel(residual is not None),
        grid=(Mp // TM, Np // TN),
        in_specs=in_specs,
        out_specs=pl.BlockSpec((TM, TN), lambda i, j: (i, j)),
        out_shape=jax.ShapeDtypeStruct((Mp, Np), out_dtype),
        compiler_params=pltpu.CompilerParams(
            dimension_semantics=("parallel", "parallel"),
            vmem_limit_bytes=32 * 1024 * 1024),
    )(*args)
    # Keep the lane-padded (Np) channel layout for downstream layers.
    return out[:M]


def _im2col(x, kh, kw, stride, pad):
    # TODO(synk): implicit im2col (folding the kh*kw taps into the grid via
    # shifted index_maps) is not cleanly expressible for strided convs with
    # plain BlockSpecs; the patch matrix is kept explicit (bf16) in XLA glue.
    n, h, w, c = x.shape
    ho = (h + 2 * pad - kh) // stride + 1
    wo = (w + 2 * pad - kw) // stride + 1
    xp = jnp.pad(x, ((0, 0), (pad, pad), (pad, pad), (0, 0)))
    taps = []
    for i in range(kh):
        for j in range(kw):
            taps.append(xp[:, i:i + stride * ho:stride,
                           j:j + stride * wo:stride, :])
    patches = jnp.concatenate(taps, axis=-1)          # (N, Ho, Wo, kh*kw*C)
    return patches.reshape(n * ho * wo, kh * kw * c), (n, ho, wo)


def conv_bn(x, w_hwio, bn_scale, bn_bias, *, stride, pad, act, residual=None):
    """Conv2d(bias=False) + BatchNorm2d(+residual)(+LeakyReLU), NHWC bf16."""
    kh, kw, cin, cout = w_hwio.shape
    cin_phys = x.shape[-1]
    if cin_phys != cin:   # activation carries lane-padded (zero) channels
        w_hwio = jnp.pad(w_hwio, ((0, 0), (0, 0), (0, cin_phys - cin), (0, 0)))
    a, (n, ho, wo) = _im2col(x, kh, kw, stride, pad)
    # Fold the BN scale into the weights (once per weight, outside the kernel).
    b = w_hwio.reshape(kh * kw * cin_phys, cout) * bn_scale[None, :]
    slope = jnp.full((cout,), NEG_SLOPE if act else 1.0, jnp.float32)
    r = None if residual is None else residual.reshape(n * ho * wo, -1)
    y = _matmul_fused(a, b, bn_bias, slope, residual=r)
    return y.reshape(n, ho, wo, -1)                   # channels lane-padded


def conv_bn_with_downsample(x, w3, bn1_scale, bn1_bias,
                            wds, bnd_scale, bnd_bias, *, stride):
    """Fused first-3x3-conv + 1x1-downsample of a downsampling BasicBlock.

    The 1x1/stride-s/pad-0 conv reads exactly the center-tap rows of the
    3x3/stride-s/pad-1 im2col matrix, so its (BN-scaled) weights are placed in
    the center-tap K rows of extra N columns.  One pallas_call emits
        out      = LeakyReLU(BN1(conv3x3(x)))      (slope = NEG_SLOPE columns)
        residual = BN_ds(conv1x1(x))               (slope = 1.0 columns)
    """
    cin = w3.shape[2]
    planes = w3.shape[3]
    cin_phys = x.shape[-1]
    if cin_phys != cin:
        w3 = jnp.pad(w3, ((0, 0), (0, 0), (0, cin_phys - cin), (0, 0)))
        wds = jnp.pad(wds, ((0, 0), (0, 0), (0, cin_phys - cin), (0, 0)))
    a, (n, ho, wo) = _im2col(x, 3, 3, stride, 1)

    b3 = w3.reshape(9 * cin_phys, planes) * bn1_scale[None, :]
    bds_center = wds.reshape(cin_phys, planes) * bnd_scale[None, :]
    bds = jnp.zeros((9 * cin_phys, planes), jnp.float32)
    bds = bds.at[4 * cin_phys:5 * cin_phys].set(bds_center)   # center tap rows
    b = jnp.concatenate([b3, bds], axis=1)                    # (K, 2*planes)

    bias = jnp.concatenate([bn1_bias, bnd_bias])
    slope = jnp.concatenate([jnp.full((planes,), NEG_SLOPE, jnp.float32),
                             jnp.ones((planes,), jnp.float32)])

    y = _matmul_fused(a, b, bias, slope)                      # (M, 2*planes)
    out = y[:, :planes].reshape(n, ho, wo, planes)
    res = y[:, planes:2 * planes].reshape(n, ho, wo, planes)
    return out, res


def maxpool_3x3_s2_p1(x):
    n, h, w, c = x.shape
    kh = kw = 3
    stride, pad = 2, 1
    ho = (h + 2 * pad - kh) // stride + 1
    wo = (w + 2 * pad - kw) // stride + 1
    xp = jnp.pad(x, ((0, 0), (pad, pad), (pad, pad), (0, 0)),
                 constant_values=float("-inf"))
    m = n * ho * wo
    Mp = _round_up(m, 16)
    if Mp > 512:
        TM = 512
        Mp = _round_up(m, TM)
    else:
        TM = Mp

    # 9 shifted-tap views passed as separate inputs (no stacked 9x HBM tensor).
    taps = []
    for i in range(kh):
        for j in range(kw):
            t = xp[:, i:i + stride * ho:stride,
                   j:j + stride * wo:stride, :].reshape(m, c)
            taps.append(jnp.pad(t, ((0, Mp - m), (0, 0))))

    out = pl.pallas_call(
        _maxpool_kernel,
        grid=(Mp // TM,),
        in_specs=[pl.BlockSpec((TM, c), lambda i: (i, 0))] * (kh * kw),
        out_specs=pl.BlockSpec((TM, c), lambda i: (i, 0)),
        out_shape=jax.ShapeDtypeStruct((Mp, c), x.dtype),
        compiler_params=pltpu.CompilerParams(
            dimension_semantics=("parallel",)),
    )(*taps)
    return out[:m].reshape(n, ho, wo, c)


def global_avgpool(x):
    n, h, w, c = x.shape
    if h * w == 1:
        # AdaptiveAvgPool2d(1) of a 1x1 map is the identity: skip the dispatch.
        return x.reshape(n, c).astype(jnp.float32)
    xr = x.reshape(n, h * w, c)
    return pl.pallas_call(
        _avgpool_kernel,
        grid=(1,),
        in_specs=[pl.BlockSpec((n, h * w, c), lambda i: (0, 0, 0))],
        out_specs=pl.BlockSpec((n, c), lambda i: (0, 0)),
        out_shape=jax.ShapeDtypeStruct((n, c), jnp.float32),
        compiler_params=pltpu.CompilerParams(
            dimension_semantics=("arbitrary",)),
    )(xr)


# --------------------------------------------------------------------------
# Parameter initialization (deterministic, matches the PyTorch __init__)
# --------------------------------------------------------------------------
def _conv_init(key, kh, kw, cin, cout):
    n = kh * kw * cout
    std = math.sqrt(2.0 / n)
    return jax.random.normal(key, (kh, kw, cin, cout), jnp.float32) * std


def _bn_params(c):
    gamma = jnp.ones((c,), jnp.float32)
    beta = jnp.zeros((c,), jnp.float32)
    mean = jnp.zeros((c,), jnp.float32)
    var = jnp.ones((c,), jnp.float32)
    scale = gamma / jnp.sqrt(var + BN_EPS)
    bias = beta - mean * scale
    return scale, bias


def init_resnet_params(key, layers=(1, 1, 1, 1), num_input_channels=17):
    keys = iter(jax.random.split(key, 64))
    params = {"conv1_w": _conv_init(next(keys), 7, 7, num_input_channels, 64),
              "bn1": _bn_params(64)}
    inplanes = 64
    stage_planes = (64, 128, 256, 512)
    stage_strides = (1, 2, 2, 2)
    stages = []
    for planes, nblocks, stride0 in zip(stage_planes, layers, stage_strides):
        blocks = []
        for bi in range(nblocks):
            stride = stride0 if bi == 0 else 1
            blk = {
                "conv1_w": _conv_init(next(keys), 3, 3, inplanes, planes),
                "bn1": _bn_params(planes),
                "conv2_w": _conv_init(next(keys), 3, 3, planes, planes),
                "bn2": _bn_params(planes),
                "stride": stride,  # python int, static
            }
            if stride != 1 or inplanes != planes:   # BasicBlock expansion = 1
                blk["ds_w"] = _conv_init(next(keys), 1, 1, inplanes, planes)
                blk["ds_bn"] = _bn_params(planes)
            blocks.append(blk)
            inplanes = planes
        stages.append(blocks)
    params["stages"] = stages
    return params


# --------------------------------------------------------------------------
# Forward pass (use_fc=False -> output of AdaptiveAvgPool2d(1): (N, 512, 1, 1))
# --------------------------------------------------------------------------
def resnet_forward(params, x_nchw):
    x = jnp.transpose(x_nchw, (0, 2, 3, 1)).astype(ACT_DTYPE)   # NCHW -> NHWC
    s1, b1 = params["bn1"]
    x = conv_bn(x, params["conv1_w"], s1, b1, stride=4, pad=3, act=True)
    x = maxpool_3x3_s2_p1(x)      # lane-padded (128-channel) layout kept
    for blocks in params["stages"]:
        for blk in blocks:
            c1s, c1b = blk["bn1"]
            c2s, c2b = blk["bn2"]
            if "ds_w" in blk:
                ds_s, ds_b = blk["ds_bn"]
                out, residual = conv_bn_with_downsample(
                    x, blk["conv1_w"], c1s, c1b, blk["ds_w"], ds_s, ds_b,
                    stride=blk["stride"])
            else:
                residual = x
                out = conv_bn(x, blk["conv1_w"], c1s, c1b,
                              stride=blk["stride"], pad=1, act=True)
            out = conv_bn(out, blk["conv2_w"], c2s, c2b,
                          stride=1, pad=1, act=True, residual=residual)
            x = out
    pooled = global_avgpool(x)                                   # (N, C) f32
    n = pooled.shape[0]
    pooled = pooled[:, :512]                                     # real channels
    return pooled.reshape(n, 512, 1, 1)                          # NCHW output


if __name__ == "__main__":
    key = jax.random.PRNGKey(0)
    pkey, xkey = jax.random.split(key)
    params = init_resnet_params(pkey, layers=(1, 1, 1, 1),
                                num_input_channels=17)
    x = jax.random.normal(xkey, (2, 17, 16, 16), jnp.float32)    # NCHW input
    out = resnet_forward(params, x)
    out = jax.block_until_ready(out)
    assert out.shape == (2, 512, 1, 1), out.shape
    assert bool(jnp.all(jnp.isfinite(out)))
    print("KERNEL_OK")
</pallas_src>

<mosaic_0001>
module attributes {stable_mosaic.version = 11 : i64} {
  func.func @kernel(%arg0: i32, %arg1: i32, %arg2: memref<32x896xbf16, #tpu.memory_space<vmem>>, %arg3: memref<896x128xbf16, #tpu.memory_space<vmem>>, %arg4: memref<1x128xf32, #tpu.memory_space<vmem>>, %arg5: memref<1x128xf32, #tpu.memory_space<vmem>>, %arg6: memref<32x128xbf16, #tpu.memory_space<vmem>>) attributes {dimension_semantics = [#tpu.dimension_semantics<parallel>, #tpu.dimension_semantics<parallel>], iteration_bounds = array<i64: 1, 1>, scalar_prefetch = 0 : i64, scratch_operands = 0 : i64, tpu.core_type = #tpu.core_type<tc>, window_params = [{transform_indices = @transform_0, window_bounds = array<i64: 32, 896>}, {transform_indices = @transform_1, window_bounds = array<i64: 896, 128>}, {transform_indices = @transform_2, window_bounds = array<i64: 1, 128>}, {transform_indices = @transform_3, window_bounds = array<i64: 1, 128>}, {transform_indices = @transform_4, window_bounds = array<i64: 32, 128>}]} {
    %c0 = arith.constant 0 : index
    %c0_0 = arith.constant 0 : index
    %0 = vector.load %arg2[%c0, %c0_0] : memref<32x896xbf16, #tpu.memory_space<vmem>>, vector<32x896xbf16>
    %c0_1 = arith.constant 0 : index
    %c0_2 = arith.constant 0 : index
    %1 = vector.load %arg3[%c0_1, %c0_2] : memref<896x128xbf16, #tpu.memory_space<vmem>>, vector<896x128xbf16>
    %cst = arith.constant dense<0.000000e+00> : vector<32x128xf32>
    %2 = tpu.matmul %0, %1, %cst {dimension_numbers = #tpu.dot_dimension_numbers<[1], [0], [0], [1], [0, 0, 1, 1], [], []>} : vector<32x896xbf16>, vector<896x128xbf16>, vector<32x128xf32> -> vector<32x128xf32>
    %c0_3 = arith.constant 0 : index
    %c0_4 = arith.constant 0 : index
    %3 = vector.load %arg4[%c0_3, %c0_4] : memref<1x128xf32, #tpu.memory_space<vmem>>, vector<1x128xf32>
    %4 = vector.broadcast %3 : vector<1x128xf32> to vector<32x128xf32>
    %5 = arith.addf %2, %4 : vector<32x128xf32>
    %cst_5 = arith.constant 0.000000e+00 : f32
    %6 = vector.broadcast %cst_5 : f32 to vector<32x128xf32>
    %7 = arith.cmpf oge, %5, %6 : vector<32x128xf32>
    %c0_6 = arith.constant 0 : index
    %c0_7 = arith.constant 0 : index
    %8 = vector.load %arg5[%c0_6, %c0_7] : memref<1x128xf32, #tpu.memory_space<vmem>>, vector<1x128xf32>
    %9 = vector.broadcast %8 : vector<1x128xf32> to vector<32x128xf32>
    %10 = arith.mulf %5, %9 : vector<32x128xf32>
    %11 = arith.select %7, %5, %10 : vector<32x128xi1>, vector<32x128xf32>
    %12 = arith.truncf %11 : vector<32x128xf32> to vector<32x128xbf16>
    %c0_8 = arith.constant 0 : index
    %c0_9 = arith.constant 0 : index
    %13 = vector.load %arg6[%c0_8, %c0_9] : memref<32x128xbf16, #tpu.memory_space<vmem>>, vector<32x128xbf16>
    tpu.vector_store %arg6[%c0_8, %c0_9], %12 {strides = array<i32>} : memref<32x128xbf16, #tpu.memory_space<vmem>>, vector<32x128xbf16>,
    return
  }
  func.func @transform_0(%arg0: i32, %arg1: i32) -> (i32, i32) {
    %c0_i32 = arith.constant 0 : i32
    %c0_i32_0 = arith.constant 0 : i32
    return %arg0, %c0_i32 : i32, i32
  }
  func.func @transform_1(%arg0: i32, %arg1: i32) -> (i32, i32) {
    %c0_i32 = arith.constant 0 : i32
    %c0_i32_0 = arith.constant 0 : i32
    return %c0_i32, %arg1 : i32, i32
  }
  func.func @transform_2(%arg0: i32, %arg1: i32) -> (i32, i32) {
    %c0_i32 = arith.constant 0 : i32
    %c0_i32_0 = arith.constant 0 : i32
    return %c0_i32, %arg1 : i32, i32
  }
  func.func @transform_3(%arg0: i32, %arg1: i32) -> (i32, i32) {
    %c0_i32 = arith.constant 0 : i32
    %c0_i32_0 = arith.constant 0 : i32
    return %c0_i32, %arg1 : i32, i32
  }
  func.func @transform_4(%arg0: i32, %arg1: i32) -> (i32, i32) {
    %c0_i32 = arith.constant 0 : i32
    return %arg0, %arg1 : i32, i32
  }
}

</mosaic_0001>

<llo_original>
// kernel: tpu_custom_call.1
$region0: #{tpu_custom_call.1}
  #allocation0 [shape = 'u32[]', space=smem, size = 0x4, offset = 0x4, fixed_abs, tag = 'smem constant byte address 0x4 - core index']
  #allocation1 [shape = 'u32[144,128]{1,0:T(1,128)}', space=vmem, size = 0x12000, scoped, tag = 'internal scratch']
  %s0 = inlined_call_operand.hbm [shape: bf16[32,896], index: 0, kind: input, shape index: {}]
  %s1 = inlined_call_operand.hbm [shape: bf16[896,128], index: 1, kind: input, shape index: {}]
  %s2 = inlined_call_operand.vmem [shape: f32[1,128], index: 2, kind: input, shape index: {}]
  %s3 = inlined_call_operand.vmem [shape: f32[1,128], index: 3, kind: input, shape index: {}]
  %s4 = inlined_call_operand.hbm [shape: bf16[32,128], index: 4, kind: output, shape index: {}]
  %s5 = sld [smem:[#allocation0]]
  $region34: #{tpu_custom_call.1} parent=0
    _
  %s7 = ssub.s32 1, %s5
  %s8 = scalar_select 0, %s7, %s5
  $region1: #{tpu_custom_call.1} parent=0
    #allocation2 [shape = 'u8[57344]{0}', space=vmem, size = 0xe000, scoped, tag = 'input window, operand 0, single buffered']
    #allocation3 [shape = 's32[1]{0}', space=sflag, size = 0x4, scoped, tag = 'scoped memory for tpu_custom_call.1']
    #allocation4 [shape = 's32[1]{0}', space=sflag, size = 0x4, scoped, tag = 'scoped memory for tpu_custom_call.1']
    #allocation5 [shape = 'u8[229376]{0}', space=vmem, size = 0x38000, scoped, tag = 'input window, operand 1, single buffered']
    #allocation6 [shape = 's32[1]{0}', space=sflag, size = 0x4, scoped, tag = 'scoped memory for tpu_custom_call.1']
    #allocation7 [shape = 'u8[8192]{0}', space=vmem, size = 0x2000, scoped, tag = 'output window, operand 0, single buffered']
    %9 = vsyncpa [#allocation3], 0
    %10 = vsyncpa [#allocation6], 0
    %11 = vsyncpa [#allocation4], 0
    // Predicated region
    $region2: #{tpu_custom_call.1} parent=1 // pred_check
      _
    $region3: #{tpu_custom_call.1} parent=1 // pred_check_branch
      %13 = sbr.rel (0) target = $region5
    $region4: #{tpu_custom_call.1} parent=1 // pred_region
      %s15 = ssub.s32 1792, 1792
      %16 = vsyncadd [#allocation3], %s15
      %s17 = sshll.u32 [#allocation2], 4
      %s18 = int_to_ptr.vmem [resolvable:$true] %s17
      %23 = dma.hbm_to_vmem [thread:$0]  %s0, 1792, %s18, [#allocation3], 448, 448, 28
    $region5: #{tpu_custom_call.1} parent=1 // pred_fallthru
      _
    // Predicated region
    $region6: #{tpu_custom_call.1} parent=1 // pred_check
      _
    $region7: #{tpu_custom_call.1} parent=1 // pred_check_branch
      %25 = sbr.rel (0) target = $region9
    $region8: #{tpu_custom_call.1} parent=1 // pred_region
      %s27 = ssub.s32 7168, 7168
      %28 = vsyncadd [#allocation6], %s27
      %s29 = sshll.u32 [#allocation5], 4
      %s30 = int_to_ptr.vmem [resolvable:$true] %s29
      %35 = dma.hbm_to_vmem [thread:$0]  %s1, 7168, %s30, [#allocation6], 64, 64, 4
    $region9: #{tpu_custom_call.1} parent=1 // pred_fallthru
      _
    // Predicated region
    $region10: #{tpu_custom_call.1} parent=1 // pred_check
      _
    $region11: #{tpu_custom_call.1} parent=1 // pred_check_branch
      %37 = sbr.rel (0) target = $region13
    $region12: #{tpu_custom_call.1} parent=1 // pred_region
      _
    $region13: #{tpu_custom_call.1} parent=1 // pred_fallthru
      _
    // Predicated region
    $region14: #{tpu_custom_call.1} parent=1 // pred_check
      _
    $region15: #{tpu_custom_call.1} parent=1 // pred_check_branch
      %39 = sbr.rel (0) target = $region17
    $region16: #{tpu_custom_call.1} parent=1 // pred_region
      _
    $region17: #{tpu_custom_call.1} parent=1 // pred_fallthru
      _
    // Predicated region
    $region18: #{tpu_custom_call.1} parent=1 // pred_check
      _
    $region19: #{tpu_custom_call.1} parent=1 // pred_check_branch
      %41 = sbr.rel (0) target = $region21
    $region20: #{tpu_custom_call.1} parent=1 // pred_region
      %42 = dma.done [#allocation3], 1792
    $region21: #{tpu_custom_call.1} parent=1 // pred_fallthru
      _
    // Predicated region
    $region22: #{tpu_custom_call.1} parent=1 // pred_check
      _
    $region23: #{tpu_custom_call.1} parent=1 // pred_check_branch
      %44 = sbr.rel (0) target = $region25
    $region24: #{tpu_custom_call.1} parent=1 // pred_region
      %45 = dma.done [#allocation6], 7168
    $region25: #{tpu_custom_call.1} parent=1 // pred_fallthru
      _
    %v47 = vld [vmem:[#allocation2] sm:$0xff]
    %v48 = vld [vmem:[#allocation2 + $0x8] sm:$0xff]
    %v49 = vld [vmem:[#allocation2 + $0x10] sm:$0xff]
    %v50 = vld [vmem:[#allocation2 + $0x18] sm:$0xf]
    %v51 = vld [vmem:[#allocation2 + $0x1c] sm:$0xff]
    %v52 = vld [vmem:[#allocation2 + $0x24] sm:$0xff]
    %v53 = vld [vmem:[#allocation2 + $0x2c] sm:$0xff]
    %v54 = vld [vmem:[#allocation2 + $0x34] sm:$0xf]
    %v55 = vld [vmem:[#allocation2 + $0x38] sm:$0xff]
    %v56 = vld [vmem:[#allocation2 + $0x40] sm:$0xff]
    %v57 = vld [vmem:[#allocation2 + $0x48] sm:$0xff]
    %v58 = vld [vmem:[#allocation2 + $0x50] sm:$0xf]
    %v59 = vld [vmem:[#allocation2 + $0x54] sm:$0xff]
    %v60 = vld [vmem:[#allocation2 + $0x5c] sm:$0xff]
    %v61 = vld [vmem:[#allocation2 + $0x64] sm:$0xff]
    %v62 = vld [vmem:[#allocation2 + $0x6c] sm:$0xf]
    %v63 = vld [vmem:[#allocation5] sm:$0xf]
    %v64 = vld [vmem:[#allocation5 + $0x4] sm:$0xf]
    %v65 = vld [vmem:[#allocation5 + $0x8] sm:$0xf]
    %v66 = vld [vmem:[#allocation5 + $0xc] sm:$0xf]
    %v67 = vld [vmem:[#allocation5 + $0x10] sm:$0xf]
    %v68 = vld [vmem:[#allocation5 + $0x14] sm:$0xf]
    %v69 = vld [vmem:[#allocation5 + $0x18] sm:$0xf]
    %v70 = vld [vmem:[#allocation5 + $0x1c] sm:$0xf]
    %v71 = vld [vmem:[#allocation5 + $0x20] sm:$0xf]
    %v72 = vld [vmem:[#allocation5 + $0x24] sm:$0xf]
    %v73 = vld [vmem:[#allocation5 + $0x28] sm:$0xf]
    %v74 = vld [vmem:[#allocation5 + $0x2c] sm:$0xf]
    %v75 = vld [vmem:[#allocation5 + $0x30] sm:$0xf]
    %v76 = vld [vmem:[#allocation5 + $0x34] sm:$0xf]
    %v77 = vld [vmem:[#allocation5 + $0x38] sm:$0xf]
    %v78 = vld [vmem:[#allocation5 + $0x3c] sm:$0xf]
    %v79 = vld [vmem:[#allocation5 + $0x40] sm:$0xf]
    %v80 = vld [vmem:[#allocation5 + $0x44] sm:$0xf]
    %v81 = vld [vmem:[#allocation5 + $0x48] sm:$0xf]
    %v82 = vld [vmem:[#allocation5 + $0x4c] sm:$0xf]
    %v83 = vld [vmem:[#allocation5 + $0x50] sm:$0xf]
    %v84 = vld [vmem:[#allocation5 + $0x54] sm:$0xf]
    %v85 = vld [vmem:[#allocation5 + $0x58] sm:$0xf]
    %v86 = vld [vmem:[#allocation5 + $0x5c] sm:$0xf]
    %v87 = vld [vmem:[#allocation5 + $0x60] sm:$0xf]
    %v88 = vld [vmem:[#allocation5 + $0x64] sm:$0xf]
    %v89 = vld [vmem:[#allocation5 + $0x68] sm:$0xf]
    %v90 = vld [vmem:[#allocation5 + $0x6c] sm:$0xf]
    %v91 = vld [vmem:[#allocation5 + $0x70] sm:$0xf]
    %v92 = vld [vmem:[#allocation5 + $0x74] sm:$0xf]
    %v93 = vld [vmem:[#allocation5 + $0x78] sm:$0xf]
    %v94 = vld [vmem:[#allocation5 + $0x7c] sm:$0xf]
    %v95 = vld [vmem:[#allocation5 + $0x80] sm:$0xf]
    %v96 = vld [vmem:[#allocation5 + $0x84] sm:$0xf]
    %v97 = vld [vmem:[#allocation5 + $0x88] sm:$0xf]
    %v98 = vld [vmem:[#allocation5 + $0x8c] sm:$0xf]
    %v99 = vld [vmem:[#allocation5 + $0x90] sm:$0xf]
    %v100 = vld [vmem:[#allocation5 + $0x94] sm:$0xf]
    %v101 = vld [vmem:[#allocation5 + $0x98] sm:$0xf]
    %v102 = vld [vmem:[#allocation5 + $0x9c] sm:$0xf]
    %v103 = vld [vmem:[#allocation5 + $0xa0] sm:$0xf]
    %v104 = vld [vmem:[#allocation5 + $0xa4] sm:$0xf]
    %v105 = vld [vmem:[#allocation5 + $0xa8] sm:$0xf]
    %v106 = vld [vmem:[#allocation5 + $0xac] sm:$0xf]
    %v107 = vld [vmem:[#allocation5 + $0xb0] sm:$0xf]
    %v108 = vld [vmem:[#allocation5 + $0xb4] sm:$0xf]
    %v109 = vld [vmem:[#allocation5 + $0xb8] sm:$0xf]
    %v110 = vld [vmem:[#allocation5 + $0xbc] sm:$0xf]
    %v111 = vld [vmem:[#allocation5 + $0xc0] sm:$0xf]
    %v112 = vld [vmem:[#allocation5 + $0xc4] sm:$0xf]
    %v113 = vld [vmem:[#allocation5 + $0xc8] sm:$0xf]
    %v114 = vld [vmem:[#allocation5 + $0xcc] sm:$0xf]
    %v115 = vld [vmem:[#allocation5 + $0xd0] sm:$0xf]
    %v116 = vld [vmem:[#allocation5 + $0xd4] sm:$0xf]
    %v117 = vld [vmem:[#allocation5 + $0xd8] sm:$0xf]
    %v118 = vld [vmem:[#allocation5 + $0xdc] sm:$0xf]
    %v119 = vld [vmem:[#allocation5 + $0xe0] sm:$0xf]
    %v120 = vld [vmem:[#allocation5 + $0xe4] sm:$0xf]
    %v121 = vld [vmem:[#allocation5 + $0xe8] sm:$0xf]
    %v122 = vld [vmem:[#allocation5 + $0xec] sm:$0xf]
    %v123 = vld [vmem:[#allocation5 + $0xf0] sm:$0xf]
    %v124 = vld [vmem:[#allocation5 + $0xf4] sm:$0xf]
    %v125 = vld [vmem:[#allocation5 + $0xf8] sm:$0xf]
    %v126 = vld [vmem:[#allocation5 + $0xfc] sm:$0xf]
    %v127 = vld [vmem:[#allocation5 + $0x100] sm:$0xf]
    %v128 = vld [vmem:[#allocation5 + $0x104] sm:$0xf]
    %v129 = vld [vmem:[#allocation5 + $0x108] sm:$0xf]
    %v130 = vld [vmem:[#allocation5 + $0x10c] sm:$0xf]
    %v131 = vld [vmem:[#allocation5 + $0x110] sm:$0xf]
    %v132 = vld [vmem:[#allocation5 + $0x114] sm:$0xf]
    %v133 = vld [vmem:[#allocation5 + $0x118] sm:$0xf]
    %v134 = vld [vmem:[#allocation5 + $0x11c] sm:$0xf]
    %v135 = vld [vmem:[#allocation5 + $0x120] sm:$0xf]
    %v136 = vld [vmem:[#allocation5 + $0x124] sm:$0xf]
    %v137 = vld [vmem:[#allocation5 + $0x128] sm:$0xf]
    %v138 = vld [vmem:[#allocation5 + $0x12c] sm:$0xf]
    %v139 = vld [vmem:[#allocation5 + $0x130] sm:$0xf]
    %v140 = vld [vmem:[#allocation5 + $0x134] sm:$0xf]
    %v141 = vld [vmem:[#allocation5 + $0x138] sm:$0xf]
    %v142 = vld [vmem:[#allocation5 + $0x13c] sm:$0xf]
    %v143 = vld [vmem:[#allocation5 + $0x140] sm:$0xf]
    %v144 = vld [vmem:[#allocation5 + $0x144] sm:$0xf]
    %v145 = vld [vmem:[#allocation5 + $0x148] sm:$0xf]
    %v146 = vld [vmem:[#allocation5 + $0x14c] sm:$0xf]
    %v147 = vld [vmem:[#allocation5 + $0x150] sm:$0xf]
    %v148 = vld [vmem:[#allocation5 + $0x154] sm:$0xf]
    %v149 = vld [vmem:[#allocation5 + $0x158] sm:$0xf]
    %v150 = vld [vmem:[#allocation5 + $0x15c] sm:$0xf]
    %v151 = vld [vmem:[#allocation5 + $0x160] sm:$0xf]
    %v152 = vld [vmem:[#allocation5 + $0x164] sm:$0xf]
    %v153 = vld [vmem:[#allocation5 + $0x168] sm:$0xf]
    %v154 = vld [vmem:[#allocation5 + $0x16c] sm:$0xf]
    %v155 = vld [vmem:[#allocation5 + $0x170] sm:$0xf]
    %v156 = vld [vmem:[#allocation5 + $0x174] sm:$0xf]
    %v157 = vld [vmem:[#allocation5 + $0x178] sm:$0xf]
    %v158 = vld [vmem:[#allocation5 + $0x17c] sm:$0xf]
    %v159 = vld [vmem:[#allocation5 + $0x180] sm:$0xf]
    %v160 = vld [vmem:[#allocation5 + $0x184] sm:$0xf]
    %v161 = vld [vmem:[#allocation5 + $0x188] sm:$0xf]
    %v162 = vld [vmem:[#allocation5 + $0x18c] sm:$0xf]
    %v163 = vld [vmem:[#allocation5 + $0x190] sm:$0xf]
    %v164 = vld [vmem:[#allocation5 + $0x194] sm:$0xf]
    %v165 = vld [vmem:[#allocation5 + $0x198] sm:$0xf]
    %v166 = vld [vmem:[#allocation5 + $0x19c] sm:$0xf]
    %v167 = vld [vmem:[#allocation5 + $0x1a0] sm:$0xf]
    %v168 = vld [vmem:[#allocation5 + $0x1a4] sm:$0xf]
    %v169 = vld [vmem:[#allocation5 + $0x1a8] sm:$0xf]
    %v170 = vld [vmem:[#allocation5 + $0x1ac] sm:$0xf]
    %v171 = vld [vmem:[#allocation5 + $0x1b0] sm:$0xf]
    %v172 = vld [vmem:[#allocation5 + $0x1b4] sm:$0xf]
    %v173 = vld [vmem:[#allocation5 + $0x1b8] sm:$0xf]
    %v174 = vld [vmem:[#allocation5 + $0x1bc] sm:$0xf]
    %v175 = vld [vmem:[%s2] sm:$0x1]
    %v177 = vlaneseq
    %v178 = vshrl.u32 %v177, 7
    %v179 = vsub.s32 0, %v178
    %v180 = vrot.slane %v175, %v179
    %v198 = vunpack.c.l.b16 %v47
    %v199 = vunpack.c.h.b16 %v47
    %v200 = vunpack.c.l.b16 %v48
    %v201 = vunpack.c.h.b16 %v48
    %v202 = vunpack.c.l.b16 %v49
    %v203 = vunpack.c.h.b16 %v49
    %v204 = vunpack.c.l.b16 %v50
    %v205 = vunpack.c.l.b16 %v51
    %v206 = vunpack.c.h.b16 %v51
    %v207 = vunpack.c.l.b16 %v52
    %v208 = vunpack.c.h.b16 %v52
    %v209 = vunpack.c.l.b16 %v53
    %v210 = vunpack.c.h.b16 %v53
    %v211 = vunpack.c.l.b16 %v54
    %v212 = vunpack.c.l.b16 %v55
    %v213 = vunpack.c.h.b16 %v55
    %v214 = vunpack.c.l.b16 %v56
    %v215 = vunpack.c.h.b16 %v56
    %v216 = vunpack.c.l.b16 %v57
    %v217 = vunpack.c.h.b16 %v57
    %v218 = vunpack.c.l.b16 %v58
    %v219 = vunpack.c.l.b16 %v59
    %v220 = vunpack.c.h.b16 %v59
    %v221 = vunpack.c.l.b16 %v60
    %v222 = vunpack.c.h.b16 %v60
    %v223 = vunpack.c.l.b16 %v61
    %v224 = vunpack.c.h.b16 %v61
    %v225 = vunpack.c.l.b16 %v62
    %v226 = vpack.c.b16 %v205, %v198
    %v227 = vpack.c.b16 %v206, %v199
    %v228 = vpack.c.b16 %v207, %v200
    %v229 = vpack.c.b16 %v208, %v201
    %v230 = vpack.c.b16 %v209, %v202
    %v231 = vpack.c.b16 %v210, %v203
    %v232 = vpack.c.b16 %v211, %v204
    %v233 = vpack.c.b16 %v219, %v212
    %v234 = vpack.c.b16 %v220, %v213
    %v235 = vpack.c.b16 %v221, %v214
    %v236 = vpack.c.b16 %v222, %v215
    %v237 = vpack.c.b16 %v223, %v216
    %v238 = vpack.c.b16 %v224, %v217
    %v239 = vpack.c.b16 %v225, %v218
    %v366 = vunpack.c.l.b16 %v63
    %v367 = vunpack.c.l.b16 %v64
    %v368 = vunpack.c.l.b16 %v65
    %v369 = vunpack.c.l.b16 %v66
    %v370 = vunpack.c.l.b16 %v67
    %v371 = vunpack.c.l.b16 %v68
    %v372 = vunpack.c.l.b16 %v69
    %v373 = vunpack.c.l.b16 %v70
    %v374 = vunpack.c.l.b16 %v71
    %v375 = vunpack.c.l.b16 %v72
    %v376 = vunpack.c.l.b16 %v73
    %v377 = vunpack.c.l.b16 %v74
    %v378 = vunpack.c.l.b16 %v75
    %v379 = vunpack.c.l.b16 %v76
    %v380 = vunpack.c.l.b16 %v77
    %v381 = vunpack.c.l.b16 %v78
    %v382 = vunpack.c.l.b16 %v79
    %v383 = vunpack.c.l.b16 %v80
    %v384 = vunpack.c.l.b16 %v81
    %v385 = vunpack.c.l.b16 %v82
    %v386 = vunpack.c.l.b16 %v83
    %v387 = vunpack.c.l.b16 %v84
    %v388 = vunpack.c.l.b16 %v85
    %v389 = vunpack.c.l.b16 %v86
    %v390 = vunpack.c.l.b16 %v87
    %v391 = vunpack.c.l.b16 %v88
    %v392 = vunpack.c.l.b16 %v89
    %v393 = vunpack.c.l.b16 %v90
    %v394 = vunpack.c.l.b16 %v91
    %v395 = vunpack.c.l.b16 %v92
    %v396 = vunpack.c.l.b16 %v93
    %v397 = vunpack.c.l.b16 %v94
    %v398 = vunpack.c.l.b16 %v95
    %v399 = vunpack.c.l.b16 %v96
    %v400 = vunpack.c.l.b16 %v97
    %v401 = vunpack.c.l.b16 %v98
    %v402 = vunpack.c.l.b16 %v99
    %v403 = vunpack.c.l.b16 %v100
    %v404 = vunpack.c.l.b16 %v101
    %v405 = vunpack.c.l.b16 %v102
    %v406 = vunpack.c.l.b16 %v103
    %v407 = vunpack.c.l.b16 %v104
    %v408 = vunpack.c.l.b16 %v105
    %v409 = vunpack.c.l.b16 %v106
    %v410 = vunpack.c.l.b16 %v107
    %v411 = vunpack.c.l.b16 %v108
    %v412 = vunpack.c.l.b16 %v109
    %v413 = vunpack.c.l.b16 %v110
    %v414 = vunpack.c.l.b16 %v111
    %v415 = vunpack.c.l.b16 %v112
    %v416 = vunpack.c.l.b16 %v113
    %v417 = vunpack.c.l.b16 %v114
    %v418 = vunpack.c.l.b16 %v115
    %v419 = vunpack.c.l.b16 %v116
    %v420 = vunpack.c.l.b16 %v117
    %v421 = vunpack.c.l.b16 %v118
    %v422 = vunpack.c.l.b16 %v119
    %v423 = vunpack.c.l.b16 %v120
    %v424 = vunpack.c.l.b16 %v121
    %v425 = vunpack.c.l.b16 %v122
    %v426 = vunpack.c.l.b16 %v123
    %v427 = vunpack.c.l.b16 %v124
    %v428 = vunpack.c.l.b16 %v125
    %v429 = vunpack.c.l.b16 %v126
    %v430 = vunpack.c.l.b16 %v127
    %v431 = vunpack.c.l.b16 %v128
    %v432 = vunpack.c.l.b16 %v129
    %v433 = vunpack.c.l.b16 %v130
    %v434 = vunpack.c.l.b16 %v131
    %v435 = vunpack.c.l.b16 %v132
    %v436 = vunpack.c.l.b16 %v133
    %v437 = vunpack.c.l.b16 %v134
    %v438 = vunpack.c.l.b16 %v135
    %v439 = vunpack.c.l.b16 %v136
    %v440 = vunpack.c.l.b16 %v137
    %v441 = vunpack.c.l.b16 %v138
    %v442 = vunpack.c.l.b16 %v139
    %v443 = vunpack.c.l.b16 %v140
    %v444 = vunpack.c.l.b16 %v141
    %v445 = vunpack.c.l.b16 %v142
    %v446 = vunpack.c.l.b16 %v143
    %v447 = vunpack.c.l.b16 %v144
    %v448 = vunpack.c.l.b16 %v145
    %v449 = vunpack.c.l.b16 %v146
    %v450 = vunpack.c.l.b16 %v147
    %v451 = vunpack.c.l.b16 %v148
    %v452 = vunpack.c.l.b16 %v149
    %v453 = vunpack.c.l.b16 %v150
    %v454 = vunpack.c.l.b16 %v151
    %v455 = vunpack.c.l.b16 %v152
    %v456 = vunpack.c.l.b16 %v153
    %v457 = vunpack.c.l.b16 %v154
    %v458 = vunpack.c.l.b16 %v155
    %v459 = vunpack.c.l.b16 %v156
    %v460 = vunpack.c.l.b16 %v157
    %v461 = vunpack.c.l.b16 %v158
    %v462 = vunpack.c.l.b16 %v159
    %v463 = vunpack.c.l.b16 %v160
    %v464 = vunpack.c.l.b16 %v161
    %v465 = vunpack.c.l.b16 %v162
    %v466 = vunpack.c.l.b16 %v163
    %v467 = vunpack.c.l.b16 %v164
    %v468 = vunpack.c.l.b16 %v165
    %v469 = vunpack.c.l.b16 %v166
    %v470 = vunpack.c.l.b16 %v167
    %v471 = vunpack.c.l.b16 %v168
    %v472 = vunpack.c.l.b16 %v169
    %v473 = vunpack.c.l.b16 %v170
    %v474 = vunpack.c.l.b16 %v171
    %v475 = vunpack.c.l.b16 %v172
    %v476 = vunpack.c.l.b16 %v173
    %v477 = vunpack.c.l.b16 %v174
    %v478 = vpack.c.b16 %v367, %v366
    %v479 = vpack.c.b16 %v369, %v368
    %v480 = vpack.c.b16 %v371, %v370
    %v481 = vpack.c.b16 %v373, %v372
    %v482 = vpack.c.b16 %v375, %v374
    %v483 = vpack.c.b16 %v377, %v376
    %v484 = vpack.c.b16 %v379, %v378
    %v485 = vpack.c.b16 %v381, %v380
    %v486 = vpack.c.b16 %v383, %v382
    %v487 = vpack.c.b16 %v385, %v384
    %v488 = vpack.c.b16 %v387, %v386
    %v489 = vpack.c.b16 %v389, %v388
    %v490 = vpack.c.b16 %v391, %v390
    %v491 = vpack.c.b16 %v393, %v392
    %v492 = vpack.c.b16 %v395, %v394
    %v493 = vpack.c.b16 %v397, %v396
    %v494 = vpack.c.b16 %v399, %v398
    %v495 = vpack.c.b16 %v401, %v400
    %v496 = vpack.c.b16 %v403, %v402
    %v497 = vpack.c.b16 %v405, %v404
    %v498 = vpack.c.b16 %v407, %v406
    %v499 = vpack.c.b16 %v409, %v408
    %v500 = vpack.c.b16 %v411, %v410
    %v501 = vpack.c.b16 %v413, %v412
    %v502 = vpack.c.b16 %v415, %v414
    %v503 = vpack.c.b16 %v417, %v416
    %v504 = vpack.c.b16 %v419, %v418
    %v505 = vpack.c.b16 %v421, %v420
    %v506 = vpack.c.b16 %v423, %v422
    %v507 = vpack.c.b16 %v425, %v424
    %v508 = vpack.c.b16 %v427, %v426
    %v509 = vpack.c.b16 %v429, %v428
    %v510 = vpack.c.b16 %v431, %v430
    %v511 = vpack.c.b16 %v433, %v432
    %v512 = vpack.c.b16 %v435, %v434
    %v513 = vpack.c.b16 %v437, %v436
    %v514 = vpack.c.b16 %v439, %v438
    %v515 = vpack.c.b16 %v441, %v440
    %v516 = vpack.c.b16 %v443, %v442
    %v517 = vpack.c.b16 %v445, %v444
    %v518 = vpack.c.b16 %v447, %v446
    %v519 = vpack.c.b16 %v449, %v448
    %v520 = vpack.c.b16 %v451, %v450
    %v521 = vpack.c.b16 %v453, %v452
    %v522 = vpack.c.b16 %v455, %v454
    %v523 = vpack.c.b16 %v457, %v456
    %v524 = vpack.c.b16 %v459, %v458
    %v525 = vpack.c.b16 %v461, %v460
    %v526 = vpack.c.b16 %v463, %v462
    %v527 = vpack.c.b16 %v465, %v464
    %v528 = vpack.c.b16 %v467, %v466
    %v529 = vpack.c.b16 %v469, %v468
    %v530 = vpack.c.b16 %v471, %v470
    %v531 = vpack.c.b16 %v473, %v472
    %v532 = vpack.c.b16 %v475, %v474
    %v533 = vpack.c.b16 %v477, %v476
    %590 = vmatprep.subr.bf16.mxu0 0
    %591 = vmatpush1.bf16.msra.mxu0 %v478
    %592 = vmatprep.subr.bf16.mxu0 0
    %593 = vmatpush1.bf16.msra.mxu0 %v479
    %594 = vmatprep.subr.bf16.mxu0 0
    %595 = vmatpush1.bf16.msra.mxu0 %v480
    %596 = vmatprep.subr.bf16.mxu0 0
    %597 = vmatpush1.bf16.msra.mxu0 %v481
    %598 = vmatprep.subr.bf16.mxu0 0
    %599 = vmatpush1.bf16.msra.mxu0 %v482
    %600 = vmatprep.subr.bf16.mxu0 0
    %601 = vmatpush1.bf16.msra.mxu0 %v483
    %602 = vmatprep.subr.bf16.mxu0 0
    %603 = vmatpush1.bf16.msra.mxu0 %v484
    %604 = vmatprep.subr.bf16.mxu0 0
    %605 = vmatpush1.bf16.msra.mxu0 %v485
    %606 = vmatprep.subr.bf16.mxu0 0
    %607 = vmatpush1.bf16.msra.mxu0 %v486
    %608 = vmatprep.subr.bf16.mxu0 0
    %609 = vmatpush1.bf16.msra.mxu0 %v487
    %610 = vmatprep.subr.bf16.mxu0 0
    %611 = vmatpush1.bf16.msra.mxu0 %v488
    %612 = vmatprep.subr.bf16.mxu0 0
    %613 = vmatpush1.bf16.msra.mxu0 %v489
    %614 = vmatprep.subr.bf16.mxu0 0
    %615 = vmatpush1.bf16.msra.mxu0 %v490
    %616 = vmatprep.subr.bf16.mxu0 0
    %617 = vmatpush1.bf16.msra.mxu0 %v491
    %618 = vmatprep.subr.bf16.mxu0 0
    %619 = vmatpush1.bf16.msra.mxu0 %v492
    %620 = vmatprep.subr.bf16.mxu0 0
    %621 = vmatpush1.bf16.msra.mxu0 %v493
    %622 = vmatprep.mubr.bf16.mxu0 %v227
    %623 = vmatmul.mubr.bf16.gmra.mrb[0].mxu0 %v226
    %v624 = vpop.f32.mrb[0].mxu0
    %v625 = vadd.f32 %v180, %v624
    %v626 = vpop.f32.mrb[0].mxu0
    %v627 = vpop.f32.mrb[0].mxu0
    %v628 = vadd.f32 %v180, %v627
    %v629 = vpop.f32.mrb[0].mxu0
    %630 = vmatprep.mubr.bf16.mxu0 %v234
    %631 = vmatmul.mubr.bf16.gmra.mrb[0].mxu0 %v233
    %v632 = vpop.f32.mrb[0].mxu0
    %v633 = vadd.f32 %v180, %v632
    %v634 = vpop.f32.mrb[0].mxu0
    %v635 = vpop.f32.mrb[0].mxu0
    %v636 = vadd.f32 %v180, %v635
    %v637 = vpop.f32.mrb[0].mxu0
    %638 = vdwg.mxu0
    %639 = vmatprep.subr.bf16.mxu0 0
    %640 = vmatpush1.bf16.msra.mxu0 %v494
    %641 = vmatprep.subr.bf16.mxu0 0
    %642 = vmatpush1.bf16.msra.mxu0 %v495
    %643 = vmatprep.subr.bf16.mxu0 0
    %644 = vmatpush1.bf16.msra.mxu0 %v496
    %645 = vmatprep.subr.bf16.mxu0 0
    %646 = vmatpush1.bf16.msra.mxu0 %v497
    %647 = vmatprep.subr.bf16.mxu0 0
    %648 = vmatpush1.bf16.msra.mxu0 %v498
    %649 = vmatprep.subr.bf16.mxu0 0
    %650 = vmatpush1.bf16.msra.mxu0 %v499
    %651 = vmatprep.subr.bf16.mxu0 0
    %652 = vmatpush1.bf16.msra.mxu0 %v500
    %653 = vmatprep.subr.bf16.mxu0 0
    %654 = vmatpush1.bf16.msra.mxu0 %v501
    %655 = vmatprep.subr.bf16.mxu0 0
    %656 = vmatpush1.bf16.msra.mxu0 %v502
    %657 = vmatprep.subr.bf16.mxu0 0
    %658 = vmatpush1.bf16.msra.mxu0 %v503
    %659 = vmatprep.subr.bf16.mxu0 0
    %660 = vmatpush1.bf16.msra.mxu0 %v504
    %661 = vmatprep.subr.bf16.mxu0 0
    %662 = vmatpush1.bf16.msra.mxu0 %v505
    %663 = vmatprep.subr.bf16.mxu0 0
    %664 = vmatpush1.bf16.msra.mxu0 %v506
    %665 = vmatprep.subr.bf16.mxu0 0
    %666 = vmatpush1.bf16.msra.mxu0 %v507
    %667 = vmatprep.subr.bf16.mxu0 0
    %668 = vmatpush1.bf16.msra.mxu0 %v508
    %669 = vmatprep.subr.bf16.mxu0 0
    %670 = vmatpush1.bf16.msra.mxu0 %v509
    %671 = vmatprep.mubr.bf16.mxu0 %v229
    %672 = vmatmul.mubr.bf16.gmra.mrb[0].mxu0 %v228
    %v673 = vpop.f32.mrb[0].mxu0
    %v674 = vadd.f32 %v625, %v673
    %v675 = vpop.f32.mrb[0].mxu0
    %v676 = vpop.f32.mrb[0].mxu0
    %v677 = vadd.f32 %v628, %v676
    %v678 = vpop.f32.mrb[0].mxu0
    %679 = vmatprep.mubr.bf16.mxu0 %v236
    %680 = vmatmul.mubr.bf16.gmra.mrb[0].mxu0 %v235
    %v681 = vpop.f32.mrb[0].mxu0
    %v682 = vadd.f32 %v633, %v681
    %v683 = vpop.f32.mrb[0].mxu0
    %v684 = vpop.f32.mrb[0].mxu0
    %v685 = vadd.f32 %v636, %v684
    %v686 = vpop.f32.mrb[0].mxu0
    %687 = vdwg.mxu0
    %688 = vmatprep.subr.bf16.mxu0 0
    %689 = vmatpush1.bf16.msra.mxu0 %v510
    %690 = vmatprep.subr.bf16.mxu0 0
    %691 = vmatpush1.bf16.msra.mxu0 %v511
    %692 = vmatprep.subr.bf16.mxu0 0
    %693 = vmatpush1.bf16.msra.mxu0 %v512
    %694 = vmatprep.subr.bf16.mxu0 0
    %695 = vmatpush1.bf16.msra.mxu0 %v513
    %696 = vmatprep.subr.bf16.mxu0 0
    %697 = vmatpush1.bf16.msra.mxu0 %v514
    %698 = vmatprep.subr.bf16.mxu0 0
    %699 = vmatpush1.bf16.msra.mxu0 %v515
    %700 = vmatprep.subr.bf16.mxu0 0
    %701 = vmatpush1.bf16.msra.mxu0 %v516
    %702 = vmatprep.subr.bf16.mxu0 0
    %703 = vmatpush1.bf16.msra.mxu0 %v517
    %704 = vmatprep.subr.bf16.mxu0 0
    %705 = vmatpush1.bf16.msra.mxu0 %v518
    %706 = vmatprep.subr.bf16.mxu0 0
    %707 = vmatpush1.bf16.msra.mxu0 %v519
    %708 = vmatprep.subr.bf16.mxu0 0
    %709 = vmatpush1.bf16.msra.mxu0 %v520
    %710 = vmatprep.subr.bf16.mxu0 0
    %711 = vmatpush1.bf16.msra.mxu0 %v521
    %712 = vmatprep.subr.bf16.mxu0 0
    %713 = vmatpush1.bf16.msra.mxu0 %v522
    %714 = vmatprep.subr.bf16.mxu0 0
    %715 = vmatpush1.bf16.msra.mxu0 %v523
    %716 = vmatprep.subr.bf16.mxu0 0
    %717 = vmatpush1.bf16.msra.mxu0 %v524
    %718 = vmatprep.subr.bf16.mxu0 0
    %719 = vmatpush1.bf16.msra.mxu0 %v525
    %720 = vmatprep.mubr.bf16.mxu0 %v231
    %721 = vmatmul.mubr.bf16.gmra.mrb[0].mxu0 %v230
    %v722 = vpop.f32.mrb[0].mxu0
    %v723 = vadd.f32 %v674, %v722
    %v724 = vpop.f32.mrb[0].mxu0
    %v725 = vpop.f32.mrb[0].mxu0
    %v726 = vadd.f32 %v677, %v725
    %v727 = vpop.f32.mrb[0].mxu0
    %728 = vmatprep.mubr.bf16.mxu0 %v238
    %729 = vmatmul.mubr.bf16.gmra.mrb[0].mxu0 %v237
    %v730 = vpop.f32.mrb[0].mxu0
    %v731 = vadd.f32 %v682, %v730
    %v732 = vpop.f32.mrb[0].mxu0
    %v733 = vpop.f32.mrb[0].mxu0
    %v734 = vadd.f32 %v685, %v733
    %v735 = vpop.f32.mrb[0].mxu0
    %736 = vdwg.mxu0
    %737 = vmatprep.subr.bf16.mxu0 0
    %738 = vmatpush1.bf16.msra.mxu0 %v526
    %739 = vmatprep.subr.bf16.mxu0 0
    %740 = vmatpush1.bf16.msra.mxu0 %v527
    %741 = vmatprep.subr.bf16.mxu0 0
    %742 = vmatpush1.bf16.msra.mxu0 %v528
    %743 = vmatprep.subr.bf16.mxu0 0
    %744 = vmatpush1.bf16.msra.mxu0 %v529
    %745 = vmatprep.subr.bf16.mxu0 0
    %746 = vmatpush1.bf16.msra.mxu0 %v530
    %747 = vmatprep.subr.bf16.mxu0 0
    %748 = vmatpush1.bf16.msra.mxu0 %v531
    %749 = vmatprep.subr.bf16.mxu0 0
    %750 = vmatpush1.bf16.msra.mxu0 %v532
    %751 = vmatprep.subr.bf16.mxu0 0
    %752 = vmatpush1.bf16.msra.mxu0 %v533
    %753 = vmatprep.subr.bf16.mxu0 0
    %754 = vmatpush1.bf16.msra.mxu0 0
    %755 = vmatprep.subr.bf16.mxu0 0
    %756 = vmatpush1.bf16.msra.mxu0 0
    %757 = vmatprep.subr.bf16.mxu0 0
    %758 = vmatpush1.bf16.msra.mxu0 0
    %759 = vmatprep.subr.bf16.mxu0 0
    %760 = vmatpush1.bf16.msra.mxu0 0
    %761 = vmatprep.subr.bf16.mxu0 0
    %762 = vmatpush1.bf16.msra.mxu0 0
    %763 = vmatprep.subr.bf16.mxu0 0
    %764 = vmatpush1.bf16.msra.mxu0 0
    %765 = vmatprep.subr.bf16.mxu0 0
    %766 = vmatpush1.bf16.msra.mxu0 0
    %767 = vmatprep.subr.bf16.mxu0 0
    %768 = vmatpush1.bf16.msra.mxu0 0
    %769 = vmatprep.mubr.bf16.mxu0 0
    %770 = vmatmul.mubr.bf16.gmra.mrb[0].mxu0 %v232
    %v771 = vpop.f32.mrb[0].mxu0
    %v772 = vadd.f32 %v723, %v771
    %v773 = vpop.f32.mrb[0].mxu0
    %v774 = vpop.f32.mrb[0].mxu0
    %v775 = vadd.f32 %v726, %v774
    %v776 = vpop.f32.mrb[0].mxu0
    %777 = vmatprep.mubr.bf16.mxu0 0
    %778 = vmatmul.mubr.bf16.gmra.mrb[0].mxu0 %v239
    %v779 = vpop.f32.mrb[0].mxu0
    %v780 = vadd.f32 %v731, %v779
    %v781 = vpop.f32.mrb[0].mxu0
    %v782 = vpop.f32.mrb[0].mxu0
    %v783 = vadd.f32 %v734, %v782
    %v784 = vpop.f32.mrb[0].mxu0
    %785 = vdwg.mxu0
    %vm786 = vcmp.ge.f32.partialorder %v772, 0.0
    %vm787 = vcmp.ge.f32.partialorder %v775, 0.0
    %vm788 = vcmp.ge.f32.partialorder %v780, 0.0
    %vm789 = vcmp.ge.f32.partialorder %v783, 0.0
    %v790 = vld [vmem:[%s3] sm:$0x1]
    %v792 = vlaneseq
    %v793 = vshrl.u32 %v792, 7
    %v794 = vsub.s32 0, %v793
    %v795 = vrot.slane %v790, %v794
    %v797 = vmul.f32 %v772, %v795
    %v798 = vmul.f32 %v775, %v795
    %v799 = vmul.f32 %v780, %v795
    %v800 = vmul.f32 %v783, %v795
    %v801 = vsel %vm786, %v772, %v797
    %v802 = vsel %vm787, %v775, %v798
    %v803 = vsel %vm788, %v780, %v799
    %v804 = vsel %vm789, %v783, %v800
    %v805 = vpack.c.bf16 %v802, %v801
    %v806 = vpack.c.bf16 %v804, %v803
    %v809 = vunpack.c.l.b16 %v805
    %v810 = vunpack.c.h.b16 %v805
    %v811 = vunpack.c.l.b16 %v806
    %v812 = vunpack.c.h.b16 %v806
    %v813 = vpack.c.b16 %v809, %v809
    %v814 = vpack.c.b16 %v810, %v810
    %v815 = vpack.c.b16 %v811, %v811
    %v816 = vpack.c.b16 %v812, %v812
    %821 = vst [vmem:[#allocation7] sm:$0xf] %v813
    %822 = vst [vmem:[#allocation7 + $0x4] sm:$0xf] %v814
    %823 = vst [vmem:[#allocation7 + $0x8] sm:$0xf] %v815
    %824 = vst [vmem:[#allocation7 + $0xc] sm:$0xf] %v816
    // Predicated region
    $region26: #{tpu_custom_call.1} parent=1 // pred_check
      _
    $region27: #{tpu_custom_call.1} parent=1 // pred_check_branch
      %826 = sbr.rel (0) target = $region29
    $region28: #{tpu_custom_call.1} parent=1 // pred_region
      %s828 = ssub.s32 256, 256
      %829 = vsyncadd [#allocation4], %s828
      %s830 = sshll.u32 [#allocation7], 4
      %s831 = int_to_ptr.vmem [resolvable:$true] %s830
      %836 = dma.vmem_to_hbm [thread:$0]  %s831, 256, %s4, [#allocation4], 64, 64, 4
    $region29: #{tpu_custom_call.1} parent=1 // pred_fallthru
      _
    // Predicated region
    $region30: #{tpu_custom_call.1} parent=1 // pred_check
      _
    $region31: #{tpu_custom_call.1} parent=1 // pred_check_branch
      %838 = sbr.rel (0) target = $region33
    $region32: #{tpu_custom_call.1} parent=1 // pred_region
      %839 = dma.done [#allocation4], 256
    $region33: #{tpu_custom_call.1} parent=1 // pred_fallthru
      _
    %840 = vsyncpa [#allocation3], 1
    %841 = vsyncpa [#allocation6], 1
    %842 = vsyncpa [#allocation4], 1

</llo_original>
